<compile_context>
chip_gen: v5e
topology: v5e:2x2
jax: 0.10.0
libtpu: 0.0.40
codegen_flags: <defaults>
</compile_context>

<pallas_src>
import functools

import jax
import jax.numpy as jnp
from jax import lax
from jax.experimental import pallas as pl
from jax.experimental.pallas import tpu as pltpu

LANES = 128     # f32 lane width
SUBLANES = 8    # f32 sublane count


def _round_up(x, m):
    return ((x + m - 1) // m) * m


def _pick_chunk(seq_len, target=64):
    """Largest divisor of seq_len that is <= target (sequence chunk size)."""
    ts = min(seq_len, target)
    while seq_len % ts:
        ts -= 1
    return ts


# ----------------------------------------------------------------------------
# Kernel 1: embedding lookup as a scalar-prefetch row gather.
#   Token ids sit in SMEM; every grid step DMAs exactly one (1, 1, Ep) row of
#   the (V, 1, Ep) embedding table via a data-dependent BlockSpec index_map
#   and copies it to output row i.
# ----------------------------------------------------------------------------
def _embed_gather_kernel(ids_ref, row_ref, out_ref):
    del ids_ref                      # consumed by the index_maps only
    out_ref[...] = row_ref[...]


def embedding_lookup(ids_flat, table_3d):
    """ids_flat: (N,) int32; table_3d: (V, 1, Ep) f32 -> (N, Ep) f32."""
    n = ids_flat.shape[0]
    _, _, ep = table_3d.shape
    out = pl.pallas_call(
        _embed_gather_kernel,
        out_shape=jax.ShapeDtypeStruct((n, 1, ep), table_3d.dtype),
        grid_spec=pltpu.PrefetchScalarGridSpec(
            num_scalar_prefetch=1,
            grid=(n,),
            in_specs=[pl.BlockSpec((1, 1, ep), lambda i, ids: (ids[i], 0, 0))],
            out_specs=pl.BlockSpec((1, 1, ep), lambda i, ids: (i, 0, 0)),
        ),
        compiler_params=pltpu.CompilerParams(
            dimension_semantics=("arbitrary",)),
    )(ids_flat, table_3d)
    return out.reshape(n, ep)


# ----------------------------------------------------------------------------
# Kernel 2: single-layer LSTM over one sequence chunk.
#   x_ref   : (ts*bp, Ip)  chunk input rows (bp rows per time step)   f32
#   h0/c0   : (bp, hp)     initial state (read at chunk 0 only)       f32
#   wih_ref : (Ip, 4hp)    W_ih^T                                     bf16
#   whh_ref : (hp, 4hp)    W_hh^T                                     bf16
#   b_ref   : (1, 4hp)     b_ih + b_hh                                f32
# outputs:
#   y_ref   : (ts*bp, hp)  chunk hidden states                        f32
#   hT/cT   : (bp, hp)     final state (resident across chunks)       f32
# scratch:
#   h_scr, c_scr : (bp, hp)       running state, persists across chunks
#   gx_scr       : (ts*bp, 4hp)   hoisted input projection for this chunk
# ----------------------------------------------------------------------------
def _lstm_chunk_kernel(x_ref, h0_ref, c0_ref, wih_ref, whh_ref, b_ref,
                       y_ref, hT_ref, cT_ref,
                       h_scr, c_scr, gx_scr,
                       *, ts, bp, hp, unroll):
    @pl.when(pl.program_id(0) == 0)
    def _init():
        h_scr[...] = h0_ref[...]
        c_scr[...] = c0_ref[...]

    # Hoisted input projection: one well-shaped MXU matmul per chunk,
    # bias pre-summed and folded in (removed from the serial loop).
    gx_scr[...] = jnp.dot(
        x_ref[...].astype(jnp.bfloat16), wih_ref[...],
        preferred_element_type=jnp.float32) + b_ref[...]

    def step(t, carry):
        row = pl.multiple_of(t * bp, bp)
        gates = gx_scr[pl.ds(row, bp), :] + jnp.dot(
            h_scr[...].astype(jnp.bfloat16), whh_ref[...],
            preferred_element_type=jnp.float32)
        # hp is a multiple of 128 -> lane-aligned gate slices.
        i_g = jax.nn.sigmoid(gates[:, 0 * hp:1 * hp])
        f_g = jax.nn.sigmoid(gates[:, 1 * hp:2 * hp])
        g_g = jnp.tanh(gates[:, 2 * hp:3 * hp])
        o_g = jax.nn.sigmoid(gates[:, 3 * hp:4 * hp])
        c_new = f_g * c_scr[...] + i_g * g_g
        h_new = o_g * jnp.tanh(c_new)
        c_scr[...] = c_new
        h_scr[...] = h_new
        y_ref[pl.ds(row, bp), :] = h_new
        return carry

    lax.fori_loop(0, ts, step, 0, unroll=unroll)

    hT_ref[...] = h_scr[...]
    cT_ref[...] = c_scr[...]


def lstm_layer(x, h0p, c0p, layer, *, seq_len, bp):
    """x: (seq_len*bp, Ip) f32; h0p/c0p: (bp, hp) f32; layer: prepared dict."""
    nb, ip = x.shape
    hp = layer["hp"]
    ts = _pick_chunk(seq_len)
    num_chunks = seq_len // ts
    unroll = True if ts <= 16 else 4
    row_blk = ts * bp
    kernel = functools.partial(_lstm_chunk_kernel,
                               ts=ts, bp=bp, hp=hp, unroll=unroll)
    y, h_t, c_t = pl.pallas_call(
        kernel,
        out_shape=(jax.ShapeDtypeStruct((nb, hp), jnp.float32),
                   jax.ShapeDtypeStruct((bp, hp), jnp.float32),
                   jax.ShapeDtypeStruct((bp, hp), jnp.float32)),
        grid_spec=pltpu.PrefetchScalarGridSpec(
            num_scalar_prefetch=0,
            grid=(num_chunks,),
            in_specs=[
                pl.BlockSpec((row_blk, ip), lambda c: (c, 0)),
                pl.BlockSpec((bp, hp), lambda c: (0, 0)),
                pl.BlockSpec((bp, hp), lambda c: (0, 0)),
                pl.BlockSpec((ip, 4 * hp), lambda c: (0, 0)),
                pl.BlockSpec((hp, 4 * hp), lambda c: (0, 0)),
                pl.BlockSpec((1, 4 * hp), lambda c: (0, 0)),
            ],
            out_specs=(
                pl.BlockSpec((row_blk, hp), lambda c: (c, 0)),
                pl.BlockSpec((bp, hp), lambda c: (0, 0)),
                pl.BlockSpec((bp, hp), lambda c: (0, 0)),
            ),
            scratch_shapes=[pltpu.VMEM((bp, hp), jnp.float32),
                            pltpu.VMEM((bp, hp), jnp.float32),
                            pltpu.VMEM((row_blk, 4 * hp), jnp.float32)],
        ),
        compiler_params=pltpu.CompilerParams(
            dimension_semantics=("arbitrary",)),
    )(x, h0p, c0p, layer["w_ih_t"], layer["w_hh_t"], layer["bias"])
    return y, h_t, c_t


# ----------------------------------------------------------------------------
# Parameter construction (deterministic, mirrors RNNModel.__init__ shapes).
# ----------------------------------------------------------------------------
def init_params(key, ntoken, ninp, nhid, nlayers):
    keys = jax.random.split(key, 2 + 4 * nlayers)
    initrange = 0.1
    params = {}
    params["encoder_weight"] = jax.random.uniform(
        keys[0], (ntoken, ninp), jnp.float32, -initrange, initrange)
    # decoder is part of __init__ but unused in forward
    params["decoder_weight"] = jax.random.uniform(
        keys[1], (ntoken, nhid), jnp.float32, -initrange, initrange)
    params["decoder_bias"] = jnp.zeros((ntoken,), jnp.float32)
    params["lstm"] = []
    for l in range(nlayers):
        in_sz = ninp if l == 0 else nhid
        hid_sz = nhid                        # tie_weights=False
        bound = 1.0 / jnp.sqrt(jnp.float32(hid_sz))
        k = keys[2 + 4 * l: 2 + 4 * (l + 1)]
        params["lstm"].append(dict(
            w_ih=jax.random.uniform(k[0], (4 * hid_sz, in_sz), jnp.float32,
                                    -bound, bound),
            w_hh=jax.random.uniform(k[1], (4 * hid_sz, hid_sz), jnp.float32,
                                    -bound, bound),
            b_ih=jax.random.uniform(k[2], (4 * hid_sz,), jnp.float32,
                                    -bound, bound),
            b_hh=jax.random.uniform(k[3], (4 * hid_sz,), jnp.float32,
                                    -bound, bound),
        ))
    return params


def prepare_params(params):
    """One-time conversion to kernel-friendly layouts (hoisted out of forward):
       - embedding table lane-padded and reshaped to (V, 1, Ep) for row gather
       - W_ih^T / W_hh^T in bf16 with the gate axis padded per-gate so each
         gate slice is a clean multiple-of-128 lane range
       - b_ih + b_hh pre-summed into a single (1, 4*Hp) f32 bias
    """
    v, e = params["encoder_weight"].shape
    ep = _round_up(e, LANES)
    enc = jnp.pad(params["encoder_weight"], ((0, 0), (0, ep - e)))
    prepared = {"encoder_table": enc.reshape(v, 1, ep), "lstm": []}
    for lp in params["lstm"]:
        four_h, in_sz = lp["w_ih"].shape
        h = four_h // 4
        hp = _round_up(h, LANES)
        ip = _round_up(in_sz, LANES)
        w_ih = lp["w_ih"].reshape(4, h, in_sz)
        w_ih = jnp.pad(w_ih, ((0, 0), (0, hp - h), (0, ip - in_sz)))
        w_ih_t = w_ih.reshape(4 * hp, ip).T.astype(jnp.bfloat16)
        w_hh = lp["w_hh"].reshape(4, h, h)
        w_hh = jnp.pad(w_hh, ((0, 0), (0, hp - h), (0, hp - h)))
        w_hh_t = w_hh.reshape(4 * hp, hp).T.astype(jnp.bfloat16)
        b = (lp["b_ih"] + lp["b_hh"]).reshape(4, h)
        b = jnp.pad(b, ((0, 0), (0, hp - h))).reshape(1, 4 * hp)
        prepared["lstm"].append(dict(
            w_ih_t=w_ih_t, w_hh_t=w_hh_t, bias=b,
            H=h, hp=hp, in_sz=in_sz, ip=ip))
    return prepared


def init_hidden(bsz, nhid, nlayers):
    return [(jnp.zeros((1, bsz, nhid), jnp.float32),
             jnp.zeros((1, bsz, nhid), jnp.float32)) for _ in range(nlayers)]


# ----------------------------------------------------------------------------
# Full forward pass (eval mode: every dropout is identity).
# ----------------------------------------------------------------------------
def rnn_model_forward(prepared, tokens, hidden):
    S, B = tokens.shape
    bp = _round_up(B, SUBLANES)

    # encoder: pad batch to a sublane multiple (padded rows use token 0 and
    # are discarded at the end), then scalar-prefetch gather.
    tok_p = jnp.pad(tokens, ((0, 0), (0, bp - B))).astype(jnp.int32)
    ids = tok_p.reshape(S * bp)
    x = embedding_lookup(ids, prepared["encoder_table"])     # (S*bp, ninp_p)

    new_hidden = []
    for l, lp in enumerate(prepared["lstm"]):
        h, hp = lp["H"], lp["hp"]
        h0, c0 = hidden[l]                                   # (1, B, H)
        h0p = jnp.pad(h0[0], ((0, bp - B), (0, hp - h)))
        c0p = jnp.pad(c0[0], ((0, bp - B), (0, hp - h)))
        x, h_t, c_t = lstm_layer(x, h0p, c0p, lp, seq_len=S, bp=bp)
        new_hidden.append((h_t[:B, :h][None], c_t[:B, :h][None]))

    h_last = prepared["lstm"][-1]["H"]
    hp_last = prepared["lstm"][-1]["hp"]
    y = x.reshape(S, bp, hp_last)[:, :B, :h_last]
    result = y.reshape(S * B, h_last)
    return result, new_hidden


# ----------------------------------------------------------------------------
# Pure-JAX f32 reference (for correctness check of the kernels).
# ----------------------------------------------------------------------------
def lstm_layer_ref(x, h0, c0, w_ih, w_hh, b_ih, b_hh):
    H = h0.shape[-1]

    def step(carry, x_t):
        h, c = carry
        gates = x_t @ w_ih.T + b_ih + h @ w_hh.T + b_hh
        i = jax.nn.sigmoid(gates[:, 0 * H:1 * H])
        f = jax.nn.sigmoid(gates[:, 1 * H:2 * H])
        g = jnp.tanh(gates[:, 2 * H:3 * H])
        o = jax.nn.sigmoid(gates[:, 3 * H:4 * H])
        c = f * c + i * g
        h = o * jnp.tanh(c)
        return (h, c), h

    (hT, cT), ys = lax.scan(step, (h0[0], c0[0]), x)
    return ys, hT[None], cT[None]


def rnn_model_forward_ref(params, tokens, hidden):
    raw_output = params["encoder_weight"][tokens]
    new_hidden = []
    for l, lp in enumerate(params["lstm"]):
        h0, c0 = hidden[l]
        raw_output, hT, cT = lstm_layer_ref(raw_output, h0, c0,
                                            lp["w_ih"], lp["w_hh"],
                                            lp["b_ih"], lp["b_hh"])
        new_hidden.append((hT, cT))
    S, B, H = raw_output.shape
    return raw_output.reshape(S * B, H), new_hidden


if __name__ == "__main__":
    # Small config consistent with the module: RNNModel(batch, 'LSTM', ...)
    ntoken, ninp, nhid, nlayers = 64, 32, 32, 2
    seq, batch = 8, 2

    key = jax.random.PRNGKey(0)
    pkey, tkey = jax.random.split(key)
    params = init_params(pkey, ntoken, ninp, nhid, nlayers)
    prepared = prepare_params(params)
    tokens = jax.random.randint(tkey, (seq, batch), 0, ntoken, dtype=jnp.int32)
    hidden = init_hidden(batch, nhid, nlayers)

    result, new_hidden = rnn_model_forward(prepared, tokens, hidden)
    jax.block_until_ready(result)
    jax.block_until_ready(new_hidden)

    # correctness check against pure-JAX f32 reference (bf16 matmul operands
    # in the kernel -> loosened tolerance).
    result_ref, new_hidden_ref = rnn_model_forward_ref(params, tokens, hidden)
    assert result.shape == (seq * batch, nhid)
    assert jnp.allclose(result, result_ref, rtol=2e-2, atol=2e-2)
    for (h, c), (hr, cr) in zip(new_hidden, new_hidden_ref):
        assert h.shape == hr.shape and c.shape == cr.shape
        assert jnp.allclose(h, hr, rtol=2e-2, atol=2e-2)
        assert jnp.allclose(c, cr, rtol=2e-2, atol=2e-2)

    print("KERNEL_OK")
</pallas_src>

<mosaic_0001>
module attributes {stable_mosaic.version = 11 : i64} {
  func.func @_embed_gather_kernel(%arg0: i32, %arg1: memref<64xi32, #tpu.memory_space<smem>>, %arg2: memref<1x1x128xf32, #tpu.memory_space<vmem>>, %arg3: memref<1x1x128xf32, #tpu.memory_space<vmem>>) attributes {dimension_semantics = [#tpu.dimension_semantics<arbitrary>], iteration_bounds = array<i64: 64>, scalar_prefetch = 1 : i64, scratch_operands = 0 : i64, tpu.core_type = #tpu.core_type<tc>, window_params = [{transform_indices = @transform_0, window_bounds = array<i64: 1, 1, 128>}, {transform_indices = @transform_1, window_bounds = array<i64: 1, 1, 128>}]} {
    %c0 = arith.constant 0 : index
    %c0_0 = arith.constant 0 : index
    %c0_1 = arith.constant 0 : index
    %0 = vector.load %arg2[%c0, %c0_0, %c0_1] : memref<1x1x128xf32, #tpu.memory_space<vmem>>, vector<1x1x128xf32>
    %c0_2 = arith.constant 0 : index
    %c0_3 = arith.constant 0 : index
    %c0_4 = arith.constant 0 : index
    %1 = vector.load %arg3[%c0_2, %c0_3, %c0_4] : memref<1x1x128xf32, #tpu.memory_space<vmem>>, vector<1x1x128xf32>
    tpu.vector_store %arg3[%c0_2, %c0_3, %c0_4], %0 {strides = array<i32>} : memref<1x1x128xf32, #tpu.memory_space<vmem>>, vector<1x1x128xf32>,
    return
  }
  func.func @transform_0(%arg0: i32, %arg1: memref<64xi32, #tpu.memory_space<smem>>) -> (i32, i32, i32) {
    %0 = arith.index_cast %arg0 : i32 to index
    %1 = memref.load %arg1[%0] : memref<64xi32, #tpu.memory_space<smem>>
    %c0_i32 = arith.constant 0 : i32
    %c0_i32_0 = arith.constant 0 : i32
    %c0_i32_1 = arith.constant 0 : i32
    return %1, %c0_i32, %c0_i32_0 : i32, i32, i32
  }
  func.func @transform_1(%arg0: i32, %arg1: memref<64xi32, #tpu.memory_space<smem>>) -> (i32, i32, i32) {
    %c0_i32 = arith.constant 0 : i32
    %c0_i32_0 = arith.constant 0 : i32
    %c0_i32_1 = arith.constant 0 : i32
    return %arg0, %c0_i32, %c0_i32_0 : i32, i32, i32
  }
}

</mosaic_0001>

<llo_original>
// kernel: tpu_custom_call.1
$region0: #{tpu_custom_call.1}
  #allocation0 [shape = 'u32[]', space=smem, size = 0x4, offset = 0x4, fixed_abs, tag = 'smem constant byte address 0x4 - core index']
  #allocation1 [shape = 'u32[72,128]{1,0:T(1,128)}', space=vmem, size = 0x9000, scoped, tag = 'internal scratch']
  #allocation2 [shape = 's32[1]{0}', space=sflag, size = 0x4, scoped, tag = 'scoped memory for tpu_custom_call.1']
  #allocation3 [shape = 'u8[512]{0}', space=smem, size = 0x200, scoped, tag = 'prefetched SMEM operand 0']
  %s0 = inlined_call_operand.hbm [shape: s32[64], index: 0, kind: input, shape index: {}]
  %s1 = inlined_call_operand.hbm [shape: f32[64,1,128], index: 1, kind: input, shape index: {}]
  %s2 = inlined_call_operand.hbm [shape: f32[64,1,128], index: 2, kind: output, shape index: {}]
  %s3 = sld [smem:[#allocation0]]
  $region41: #{tpu_custom_call.1} parent=0
    _
  %s5 = ssub.s32 1, %s3
  %s6 = scalar_select 0, %s5, %s3
  %s8 = sshll.u32 %s0, 4
  %s9 = int_to_ptr.hbm [resolvable:$true] %s8
  %11 = dma.hbm_to_smem %s9, 16, [#allocation3], [#allocation2]
  %13 = dma.done [#allocation2], 16
  %14 = sfence
  $region1: #{tpu_custom_call.1} parent=0
    #allocation4 [shape = 'u8[1024]{0}', space=vmem, size = 0x400, scoped, tag = 'input window, operand 1']
    #allocation5 [shape = 's32[2]{0}', space=sflag, size = 0x8, scoped, tag = 'scoped memory for tpu_custom_call.1']
    #allocation6 [shape = 's32[2]{0}', space=sflag, size = 0x8, scoped, tag = 'scoped memory for tpu_custom_call.1']
    #allocation7 [shape = 'u8[1024]{0}', space=vmem, size = 0x400, scoped, tag = 'output window, operand 0']
    %15 = vsyncpa [#allocation5], 0
    %s16 = scalar_lea.sflag [#allocation5], 1
    %17 = vsyncpa %s16, 0
    %18 = vsyncpa [#allocation6], 0
    %s19 = scalar_lea.sflag [#allocation6], 1
    %20 = vsyncpa %s19, 0
    loop: start=0, step=1, limit=66
    $region2: #{tpu_custom_call.1} parent=1 // loop_pre_header
      _
    $region3: #{tpu_custom_call.1} parent=1 // loop_header
      %s22 = sphi 0, %s26
      %p23 = scmp.ge.s32.totalorder %s22, 66
      %s34 = sphi 0, %s36
      %s37 = sphi 0, %s34
      %s38 = sphi 0, %s37
      %s54 = sphi 0, %s38
      %s60 = sphi 0, %s62
      %s63 = sphi 0, %s60
      %s64 = sphi 0, %s63
      %s80 = sphi 0, %s64
    $region4: #{tpu_custom_call.1} parent=1 // loop_header_branch
      %25 = sbr.rel (%p23) target = $region8
    $region5: #{tpu_custom_call.1} parent=1 // loop_body
      %s27 = ssub.s32 %s22, 1
      %s28 = ssub.s32 %s22, 2
      %s29 = sadd.s32 %s22, 1
      %s30 = sld [smem:[#allocation3 + %s22]]
      %s31 = sld [smem:[#allocation3 + %s29]]
      %s32 = ssub.s32 %s30, %s31
      %p33 = scmp.eq.s32.totalorder %s32, 0
      %s35 = sadd.s32 %s34, 1
      %s36 = scalar_select %p33, %s34, %s35
      %p39 = pneg %p33
      %p40 = scmp.eq.s32.totalorder %s22, 63
      %p41 = por %p39, %p40
      %p42 = scmp.ne.s32.totalorder %s34, %s37
      %p43 = scmp.eq.s32.totalorder %s22, 0
      %p44 = por %p42, %p43
      %p45 = scmp.ne.s32.totalorder %s34, %s37
      %p46 = scmp.eq.s32.totalorder %s27, 63
      %p47 = por %p45, %p46
      %p48 = scmp.ne.s32.totalorder %s37, %s38
      %p49 = scmp.eq.s32.totalorder %s27, 0
      %p50 = por %p48, %p49
      %p51 = scmp.ne.s32.totalorder %s37, %s38
      %p52 = scmp.eq.s32.totalorder %s28, 63
      %p53 = por %p51, %p52
      %p55 = scmp.ne.s32.totalorder %s38, %s54
      %p56 = scmp.eq.s32.totalorder %s28, 0
      %p57 = por %p55, %p56
      %s58 = ssub.s32 %s22, %s29
      %p59 = scmp.eq.s32.totalorder %s58, 0
      %s61 = sadd.s32 %s60, 1
      %s62 = scalar_select %p59, %s60, %s61
      %p65 = pneg %p59
      %p66 = scmp.eq.s32.totalorder %s22, 63
      %p67 = por %p65, %p66
      %p68 = scmp.ne.s32.totalorder %s60, %s63
      %p69 = scmp.eq.s32.totalorder %s22, 0
      %p70 = por %p68, %p69
      %p71 = scmp.ne.s32.totalorder %s60, %s63
      %p72 = scmp.eq.s32.totalorder %s27, 63
      %p73 = por %p71, %p72
      %p74 = scmp.ne.s32.totalorder %s63, %s64
      %p75 = scmp.eq.s32.totalorder %s27, 0
      %p76 = por %p74, %p75
      %p77 = scmp.ne.s32.totalorder %s63, %s64
      %p78 = scmp.eq.s32.totalorder %s28, 63
      %p79 = por %p77, %p78
      %p81 = scmp.ne.s32.totalorder %s64, %s80
      %p82 = scmp.eq.s32.totalorder %s28, 0
      %p83 = por %p81, %p82
      %p84 = scmp.le.s32.totalorder 1, %s22
      %p85 = scmp.lt.s32.totalorder %s22, 65
      %p86 = pnand %p84, %p85
      %p87 = pneg %p86
      // Predicated region
      $region9: #{tpu_custom_call.1} parent=5 // pred_check
        _
      $region10: #{tpu_custom_call.1} parent=5 // pred_check_branch
        %89 = sbr.rel (%p86) target = $region12
      $region11: #{tpu_custom_call.1} parent=5 // pred_region
        %s90 = ssub.s32 %s22, 1
      $region12: #{tpu_custom_call.1} parent=5 // pred_fallthru
        _
      %p91 = scmp.lt.s32.totalorder %s22, 64
      // Predicated region
      $region13: #{tpu_custom_call.1} parent=5 // pred_check
        %p92 = pneg %p91
      $region14: #{tpu_custom_call.1} parent=5 // pred_check_branch
        %94 = sbr.rel (%p92) target = $region16
      $region15: #{tpu_custom_call.1} parent=5 // pred_region
        // Predicated region
        $region17: #{tpu_custom_call.1} parent=15 // pred_check
          %p95 = pneg %p44
        $region18: #{tpu_custom_call.1} parent=15 // pred_check_branch
          %97 = sbr.rel (%p95) target = $region20
        $region19: #{tpu_custom_call.1} parent=15 // pred_region
          %s98 = sand.u32 %s34, 1
          %s99 = scalar_lea.sflag [#allocation5], %s98
          %s100 = sand.u32 %s34, 1
          %s101 = scalar_lea.vmem [#allocation4], %s100
          %s102 = sld [smem:[#allocation3 + %s22]]
          %104 = vsyncadd %s99, 0
          %s105 = scalar_lea.hbm %s1, %s102
          %s107 = sshll.u32 %s105, 4
          %s108 = int_to_ptr.hbm [resolvable:$true] %s107
          %s109 = sshll.u32 %s101, 4
          %s110 = int_to_ptr.vmem [resolvable:$true] %s109
          %112 = dma.hbm_to_vmem [thread:$0]  %s108, 16, %s110, %s99
        $region20: #{tpu_custom_call.1} parent=15 // pred_fallthru
          _
      $region16: #{tpu_custom_call.1} parent=5 // pred_fallthru
        _
      %p113 = scmp.le.s32.totalorder 1, %s22
      %p114 = scmp.lt.s32.totalorder %s22, 65
      %p115 = pnand %p113, %p114
      %p116 = pneg %p115
      // Predicated region
      $region21: #{tpu_custom_call.1} parent=5 // pred_check
        _
      $region22: #{tpu_custom_call.1} parent=5 // pred_check_branch
        %118 = sbr.rel (%p115) target = $region24
      $region23: #{tpu_custom_call.1} parent=5 // pred_region
        %s119 = ssub.s32 %s22, 1
        %s120 = sand.u32 %s37, 1
        %s121 = scalar_lea.sflag [#allocation5], %s120
        %s122 = sand.u32 %s37, 1
        %s123 = scalar_lea.vmem [#allocation4], %s122
        // Predicated region
        $region25: #{tpu_custom_call.1} parent=23 // pred_check
          %p124 = pneg %p50
        $region26: #{tpu_custom_call.1} parent=23 // pred_check_branch
          %126 = sbr.rel (%p124) target = $region28
        $region27: #{tpu_custom_call.1} parent=23 // pred_region
          %128 = dma.done %s121, 16
        $region28: #{tpu_custom_call.1} parent=23 // pred_fallthru
          _
        %s129 = sand.u32 %s37, 1
        %s130 = scalar_lea.sflag [#allocation5], %s129
        %s131 = sand.u32 %s37, 1
        %s132 = scalar_lea.vmem [#allocation4], %s131
        %p133 = pneg %p50
        %p134 = pneg %p47
        %p135 = pneg %p76
        %p136 = pneg %p73
        %s137 = sand.u32 %s63, 1
        %s138 = scalar_lea.sflag [#allocation6], %s137
        %s139 = sand.u32 %s63, 1
        %s140 = scalar_lea.vmem [#allocation7], %s139
        %s141 = sld [smem:[#allocation3 + %s27]]
        %v142 = vld [vmem:[%s123] sm:$0x1]
        %143 = vst [vmem:[%s140] sm:$0x1] %v142
        %s144 = sand.u32 %s63, 1
        %s145 = scalar_lea.sflag [#allocation6], %s144
        %s146 = sand.u32 %s63, 1
        %s147 = scalar_lea.vmem [#allocation7], %s146
        // Predicated region
        $region29: #{tpu_custom_call.1} parent=23 // pred_check
          %p148 = pneg %p73
        $region30: #{tpu_custom_call.1} parent=23 // pred_check_branch
          %150 = sbr.rel (%p148) target = $region32
        $region31: #{tpu_custom_call.1} parent=23 // pred_region
          %152 = vsyncadd %s145, 0
          %s153 = scalar_lea.hbm %s2, %s27
          %s155 = sshll.u32 %s147, 4
          %s156 = int_to_ptr.vmem [resolvable:$true] %s155
          %s157 = sshll.u32 %s153, 4
          %s158 = int_to_ptr.hbm [resolvable:$true] %s157
          %160 = dma.vmem_to_hbm [thread:$0]  %s156, 16, %s158, %s145
        $region32: #{tpu_custom_call.1} parent=23 // pred_fallthru
          _
      $region24: #{tpu_custom_call.1} parent=5 // pred_fallthru
        _
      %p161 = scmp.le.s32.totalorder 2, %s22
      // Predicated region
      $region33: #{tpu_custom_call.1} parent=5 // pred_check
        %p162 = pneg %p161
      $region34: #{tpu_custom_call.1} parent=5 // pred_check_branch
        %164 = sbr.rel (%p162) target = $region36
      $region35: #{tpu_custom_call.1} parent=5 // pred_region
        %s165 = ssub.s32 %s22, 2
        // Predicated region
        $region37: #{tpu_custom_call.1} parent=35 // pred_check
          %p166 = pneg %p79
        $region38: #{tpu_custom_call.1} parent=35 // pred_check_branch
          %168 = sbr.rel (%p166) target = $region40
        $region39: #{tpu_custom_call.1} parent=35 // pred_region
          %s169 = sand.u32 %s64, 1
          %s170 = scalar_lea.sflag [#allocation6], %s169
          %s171 = sand.u32 %s64, 1
          %s172 = scalar_lea.vmem [#allocation7], %s171
          %174 = dma.done %s170, 16
        $region40: #{tpu_custom_call.1} parent=35 // pred_fallthru
          _
      $region36: #{tpu_custom_call.1} parent=5 // pred_fallthru
        _
    $region6: #{tpu_custom_call.1} parent=1 // loop_footer
      %s26 = sadd.s32 1, %s22
    $region7: #{tpu_custom_call.1} parent=1 // loop_footer_branch
      %21 = sbr.rel target = $region3
    $region8: #{tpu_custom_call.1} parent=1 // loop_exit
      _
    %175 = vsyncpa [#allocation5], 1
    %s176 = scalar_lea.sflag [#allocation5], 1
    %177 = vsyncpa %s176, 1
    %178 = vsyncpa [#allocation6], 1
    %s179 = scalar_lea.sflag [#allocation6], 1
    %180 = vsyncpa %s179, 1

</llo_original>
